<compile_context>
chip_gen: v6e
topology: v6e:2x2x1
jax: 0.10.0
libtpu: 0.0.40
codegen_flags: <defaults>
</compile_context>

<pallas_src>
import math
import functools

import jax
import jax.numpy as jnp
from jax import lax
from jax.experimental import pallas as pl
from jax.experimental.pallas import tpu as pltpu


_VMEM_LIMIT_BYTES = 48 * 1024 * 1024      # safe on v5e/v6e (128 MiB) and v7x (64 MiB)
_TARGET_BLOCK_BYTES = 4 * 1024 * 1024     # ~4 MiB per x/out block → near HBM roofline


# ---------------------------------------------------------------------------
# Parameter / buffer construction (deterministic, matches torch __init__)
# ---------------------------------------------------------------------------
def make_positional_encoding(d_model: int, max_len: int = 5000) -> jnp.ndarray:
    position = jnp.arange(max_len, dtype=jnp.float32)[:, None]            # [max_len, 1]
    div_term = jnp.exp(
        jnp.arange(0, d_model, 2, dtype=jnp.float32)
        * (-math.log(10000.0) / d_model)
    )                                                                      # [d_model/2]
    pe = jnp.zeros((max_len, 1, d_model), dtype=jnp.float32)
    pe = pe.at[:, 0, 0::2].set(jnp.sin(position * div_term))
    pe = pe.at[:, 0, 1::2].set(jnp.cos(position * div_term))
    return pe                                                              # [max_len, 1, d_model]


# ---------------------------------------------------------------------------
# Kernels  (blocks are 2-D: [seq_tile, batch*d_model] for x/out, [seq_tile, d_model] for pe)
# ---------------------------------------------------------------------------
def _pe_add_kernel(x_ref, pe_ref, o_ref, *, batch: int):
    pe = pe_ref[...]
    if batch > 1:
        pe = jnp.tile(pe, (1, batch))                    # lane-broadcast over batch
    y = x_ref[...].astype(jnp.float32) + pe
    o_ref[...] = y.astype(o_ref.dtype)


def _pe_add_dropout_kernel(seed_ref, x_ref, pe_ref, o_ref, *,
                           batch: int, p: float, seq_tile: int, n_cols: int):
    pe = pe_ref[...]
    if batch > 1:
        pe = jnp.tile(pe, (1, batch))
    y = x_ref[...].astype(jnp.float32) + pe

    # Stateless counter-based PRNG: one uint32 per element, derived from the
    # global element index and the seed via a murmur3-style finalizer.
    shape = y.shape
    rows = lax.broadcasted_iota(jnp.int32, shape, 0).astype(jnp.uint32)
    cols = lax.broadcasted_iota(jnp.int32, shape, 1).astype(jnp.uint32)
    row_off = (pl.program_id(0) * seq_tile).astype(jnp.uint32)
    gid = (row_off + rows) * jnp.uint32(n_cols) + cols

    h = gid ^ (seed_ref[0].astype(jnp.uint32) * jnp.uint32(2654435761))
    h = h * jnp.uint32(0x9E3779B1)
    h = h ^ (h >> 16)
    h = h * jnp.uint32(0x85EBCA6B)
    h = h ^ (h >> 13)
    h = h * jnp.uint32(0xC2B2AE35)
    h = h ^ (h >> 16)

    threshold = jnp.uint32(min(int(p * 4294967296.0), 4294967295))
    keep = h >= threshold                                # P(keep) = 1 - p
    scale = jnp.float32(1.0 / (1.0 - p))
    o_ref[...] = jnp.where(keep, y * scale, jnp.float32(0.0)).astype(o_ref.dtype)


# ---------------------------------------------------------------------------
# Wrapper
# ---------------------------------------------------------------------------
def _choose_seq_tile(seq_len: int, row_bytes: int, target_block_bytes: int) -> int:
    """Rows per block so one x/out block is ~target_block_bytes, multiple of 8."""
    rows = max(1, target_block_bytes // max(row_bytes, 1))
    if rows >= seq_len:
        return seq_len
    rows = max(8, (rows // 8) * 8)
    return min(rows, seq_len)


def positional_encoding_forward(
    x: jnp.ndarray,
    pe: jnp.ndarray,
    *,
    dropout_p: float = 0.1,
    training: bool = False,
    seed: int = 0,
    target_block_bytes: int = _TARGET_BLOCK_BYTES,
) -> jnp.ndarray:
    """x: [seq_len, batch, d_model]; pe: [max_len, 1, d_model]."""
    S, B, D = x.shape
    C = B * D

    # Lane/sublane-dense 2-D presentation: seq on sublanes, batch*d_model on lanes.
    x2 = x.reshape(S, C)
    pe2 = pe.reshape(pe.shape[0], D)                     # drop unit batch dim (free)

    itemsize = jnp.dtype(x.dtype).itemsize
    ts = _choose_seq_tile(S, C * itemsize, target_block_bytes)
    grid = (pl.cdiv(S, ts),)

    # pe block is (ts, D): second-to-last dim must be a multiple of 8 or equal
    # the full first dim.  Full pe table is passed whenever ts % 8 == 0
    # (no wrapper-side slice); otherwise (tiny S) slice so ts == full dim.
    pe_in = pe2 if (ts % 8 == 0) else pe2[:S]

    x_spec = pl.BlockSpec((ts, C), lambda i, *_: (i, 0))
    pe_spec = pl.BlockSpec((ts, D), lambda i, *_: (i, 0))
    out_spec = pl.BlockSpec((ts, C), lambda i, *_: (i, 0))
    out_shape = jax.ShapeDtypeStruct((S, C), x.dtype)

    compiler_params = pltpu.CompilerParams(
        dimension_semantics=("parallel",),               # independent seq blocks (megacore)
        vmem_limit_bytes=_VMEM_LIMIT_BYTES,
    )

    if (not training) or dropout_p == 0.0:
        out2 = pl.pallas_call(
            functools.partial(_pe_add_kernel, batch=B),
            out_shape=out_shape,
            grid_spec=pltpu.PrefetchScalarGridSpec(
                num_scalar_prefetch=0,
                grid=grid,
                in_specs=[x_spec, pe_spec],
                out_specs=out_spec,
            ),
            compiler_params=compiler_params,
        )(x2, pe_in)
        return out2.reshape(S, B, D)

    seed_arr = jnp.array([seed], dtype=jnp.int32)
    out2 = pl.pallas_call(
        functools.partial(
            _pe_add_dropout_kernel, batch=B, p=float(dropout_p), seq_tile=ts, n_cols=C
        ),
        out_shape=out_shape,
        grid_spec=pltpu.PrefetchScalarGridSpec(
            num_scalar_prefetch=1,                       # seed lands in SMEM
            grid=grid,
            in_specs=[x_spec, pe_spec],
            out_specs=out_spec,
        ),
        compiler_params=compiler_params,
    )(seed_arr, x2, pe_in)
    return out2.reshape(S, B, D)


# ---------------------------------------------------------------------------
# Demo / self-check
# ---------------------------------------------------------------------------
if __name__ == "__main__":
    dropout_p = 0.1
    pe_full = make_positional_encoding(128, max_len=5000)

    # ---- small shape, matches the module's documented layout ----
    d_model, seq_len, batch = 32, 8, 2
    key = jax.random.PRNGKey(0)
    x = jax.random.normal(key, (seq_len, batch, d_model), dtype=jnp.float32)
    pe = make_positional_encoding(d_model, max_len=5000)

    # eval mode (dropout is identity) — must match reference exactly
    out_eval = jax.block_until_ready(
        positional_encoding_forward(x, pe, dropout_p=dropout_p, training=False)
    )
    ref = x + pe[:seq_len]
    assert out_eval.shape == (seq_len, batch, d_model)
    assert jnp.allclose(out_eval, ref, atol=1e-6, rtol=1e-6), "eval-mode mismatch"

    # training mode — surviving entries must equal ref / (1 - p)
    out_train = jax.block_until_ready(
        positional_encoding_forward(x, pe, dropout_p=dropout_p, training=True, seed=0)
    )
    nz = out_train != 0.0
    assert jnp.allclose(
        jnp.where(nz, out_train, 0.0),
        jnp.where(nz, ref / (1.0 - dropout_p), 0.0),
        atol=1e-5, rtol=1e-5,
    ), "training-mode scaling mismatch"
    drop_frac = 1.0 - jnp.mean(nz.astype(jnp.float32))
    assert 0.0 <= float(drop_frac) <= 0.35, "dropout rate far from expected"

    # ---- larger shape exercising the multi-block grid (tiny tile forced) ----
    d2, s2, b2 = 128, 48, 4
    x2 = jax.random.normal(jax.random.PRNGKey(1), (s2, b2, d2), dtype=jnp.float32)
    pe2 = make_positional_encoding(d2, max_len=5000)
    out2 = jax.block_until_ready(
        positional_encoding_forward(
            x2, pe2, dropout_p=dropout_p, training=False,
            target_block_bytes=16 * 1024,                # force ts=8 → 6 grid steps
        )
    )
    ref2 = x2 + pe2[:s2]
    assert jnp.allclose(out2, ref2, atol=1e-6, rtol=1e-6), "multi-block eval mismatch"

    out2_train = jax.block_until_ready(
        positional_encoding_forward(
            x2, pe2, dropout_p=dropout_p, training=True, seed=7,
            target_block_bytes=16 * 1024,
        )
    )
    nz2 = out2_train != 0.0
    assert jnp.allclose(
        jnp.where(nz2, out2_train, 0.0),
        jnp.where(nz2, ref2 / (1.0 - dropout_p), 0.0),
        atol=1e-5, rtol=1e-5,
    ), "multi-block training-mode scaling mismatch"

    print("KERNEL_OK")
</pallas_src>

<mosaic_0001>
module attributes {stable_mosaic.version = 11 : i64} {
  func.func @_pe_add_kernel(%arg0: i32, %arg1: memref<8x64xf32, #tpu.memory_space<vmem>>, %arg2: memref<8x32xf32, #tpu.memory_space<vmem>>, %arg3: memref<8x64xf32, #tpu.memory_space<vmem>>) attributes {dimension_semantics = [#tpu.dimension_semantics<parallel>], iteration_bounds = array<i64: 1>, scalar_prefetch = 0 : i64, scratch_operands = 0 : i64, tpu.core_type = #tpu.core_type<tc>, window_params = [{transform_indices = @transform_0, window_bounds = array<i64: 8, 64>}, {transform_indices = @transform_1, window_bounds = array<i64: 8, 32>}, {transform_indices = @transform_2, window_bounds = array<i64: 8, 64>}]} {
    %c0 = arith.constant 0 : index
    %c0_0 = arith.constant 0 : index
    %0 = vector.load %arg2[%c0, %c0_0] : memref<8x32xf32, #tpu.memory_space<vmem>>, vector<8x32xf32>
    %1 = tpu.concatenate %0, %0 in 1 : vector<8x32xf32>, vector<8x32xf32> -> vector<8x64xf32>
    %c0_1 = arith.constant 0 : index
    %c0_2 = arith.constant 0 : index
    %2 = vector.load %arg1[%c0_1, %c0_2] : memref<8x64xf32, #tpu.memory_space<vmem>>, vector<8x64xf32>
    %3 = arith.addf %2, %1 : vector<8x64xf32>
    %c0_3 = arith.constant 0 : index
    %c0_4 = arith.constant 0 : index
    %4 = vector.load %arg3[%c0_3, %c0_4] : memref<8x64xf32, #tpu.memory_space<vmem>>, vector<8x64xf32>
    tpu.vector_store %arg3[%c0_3, %c0_4], %3 {strides = array<i32>} : memref<8x64xf32, #tpu.memory_space<vmem>>, vector<8x64xf32>,
    return
  }
  func.func @transform_0(%arg0: i32) -> (i32, i32) {
    %c0_i32 = arith.constant 0 : i32
    %c0_i32_0 = arith.constant 0 : i32
    return %arg0, %c0_i32 : i32, i32
  }
  func.func @transform_1(%arg0: i32) -> (i32, i32) {
    %c0_i32 = arith.constant 0 : i32
    %c0_i32_0 = arith.constant 0 : i32
    return %arg0, %c0_i32 : i32, i32
  }
  func.func @transform_2(%arg0: i32) -> (i32, i32) {
    %c0_i32 = arith.constant 0 : i32
    %c0_i32_0 = arith.constant 0 : i32
    return %arg0, %c0_i32 : i32, i32
  }
}

</mosaic_0001>

<llo_original>
// kernel: tpu_custom_call.1
$region0: #{tpu_custom_call.1}
  #allocation0 [shape = 'u32[]', space=smem, size = 0x4, offset = 0x4, fixed_abs, tag = 'smem constant byte address 0x4 - core index']
  #allocation1 [shape = 'u32[144,128]{1,0:T(1,128)}', space=vmem, size = 0x12000, scoped, tag = 'internal scratch']
  %s0 = inlined_call_operand.vmem [shape: f32[8,64], index: 0, kind: input, shape index: {}]
  %s1 = inlined_call_operand.vmem [shape: f32[5000,32], index: 1, kind: input, shape index: {}]
  %s2 = inlined_call_operand.hbm [shape: f32[8,64], index: 2, kind: output, shape index: {}]
  %s3 = sld [smem:[#allocation0]]
  $region18: #{tpu_custom_call.1} parent=0
    _
  %s5 = ssub.s32 1, %s3
  %s6 = scalar_select 0, %s5, %s3
  $region1: #{tpu_custom_call.1} parent=0
    #allocation2 [shape = 'u8[4096]{0}', space=vmem, size = 0x1000, scoped, tag = 'output window, operand 0, single buffered']
    #allocation3 [shape = 's32[1]{0}', space=sflag, size = 0x4, scoped, tag = 'scoped memory for tpu_custom_call.1']
    %7 = vsyncpa [#allocation3], 0
    // Predicated region
    $region2: #{tpu_custom_call.1} parent=1 // pred_check
      _
    $region3: #{tpu_custom_call.1} parent=1 // pred_check_branch
      %9 = sbr.rel (0) target = $region5
    $region4: #{tpu_custom_call.1} parent=1 // pred_region
      _
    $region5: #{tpu_custom_call.1} parent=1 // pred_fallthru
      _
    // Predicated region
    $region6: #{tpu_custom_call.1} parent=1 // pred_check
      _
    $region7: #{tpu_custom_call.1} parent=1 // pred_check_branch
      %11 = sbr.rel (0) target = $region9
    $region8: #{tpu_custom_call.1} parent=1 // pred_region
      _
    $region9: #{tpu_custom_call.1} parent=1 // pred_fallthru
      _
    %v12 = vld [vmem:[%s1] sm:$0xff]
    %14 = vrot.lane.b32.xlu0 %v12, 32
    %v15 = vpop.permute.xlu0 %14
    %vm17 = vcmask 261120
    %v18 = vsel %vm17, %v12, %v15
    %v19 = vld [vmem:[%s0] sm:$0xff]
    %v20 = vadd.f32 %v19, %v18
    %vm21 = vcmask 523264
    %22 = vst.msk [vmem:[#allocation2] sm:$0xff] %vm21, %v20
    // Predicated region
    $region10: #{tpu_custom_call.1} parent=1 // pred_check
      _
    $region11: #{tpu_custom_call.1} parent=1 // pred_check_branch
      %24 = sbr.rel (0) target = $region13
    $region12: #{tpu_custom_call.1} parent=1 // pred_region
      %s26 = ssub.s32 128, 128
      %27 = vsyncadd [#allocation3], %s26
      %s29 = sshll.u32 [#allocation2], 4
      %s30 = int_to_ptr.vmem [resolvable:$true] %s29
      %32 = dma.vmem_to_hbm [thread:$0]  %s30, 128, %s2, [#allocation3]
    $region13: #{tpu_custom_call.1} parent=1 // pred_fallthru
      _
    // Predicated region
    $region14: #{tpu_custom_call.1} parent=1 // pred_check
      _
    $region15: #{tpu_custom_call.1} parent=1 // pred_check_branch
      %34 = sbr.rel (0) target = $region17
    $region16: #{tpu_custom_call.1} parent=1 // pred_region
      %35 = dma.done [#allocation3], 128
    $region17: #{tpu_custom_call.1} parent=1 // pred_fallthru
      _
    %36 = vsyncpa [#allocation3], 1

</llo_original>
